<compile_context>
chip_gen: v7x
topology: tpu7x:2x2x1
jax: 0.10.0
libtpu: 0.0.40
codegen_flags: <defaults>
</compile_context>

<pallas_src>
import functools

import jax
import jax.numpy as jnp
from jax.experimental import pallas as pl
from jax.experimental.pallas import tpu as pltpu


# HBM storage dtype for embeddings.  In-kernel math is f32; set to jnp.float32
# for closer parity with torch float32 numerics.
EMB_DTYPE = jnp.bfloat16


def _round_up(x, m):
    return ((x + m - 1) // m) * m


def _choose_batch_tile(n_rows, row_bytes, max_rows=512, align=8,
                       vmem_budget=6 * 1024 * 1024):
    """Pick a batch-row tile (multiple of 8) and the padded row count."""
    cap = max(align, min(max_rows, vmem_budget // max(1, row_bytes)))
    cap = max(align, (cap // align) * align)
    n0 = _round_up(n_rows, align)
    if n0 <= cap:
        return n0, n0
    nsteps = -(-n0 // cap)
    tb = _round_up(-(-n0 // nsteps), align)
    return tb, tb * nsteps


# ----------------------------------------------------------------------------
# Fused Pallas kernel: whole KGPLStudent GNN forward for one tile of rows
# ----------------------------------------------------------------------------

def _student_kernel(u_ref, ent_ref, rel_ref, w_ref, wbd_ref, b_ref, bbd_ref,
                    out_ref, *, D, S, H, G):
    """
    u_ref   : [TB, D]        user embedding of each row
    ent_ref : [TB, NT*D]     entity embeddings, all hops (hop-major, lane-dense)
    rel_ref : [TB, NR*D]     relation embeddings of all hop edges
    w_ref   : [H, D, D]      per-iteration weight (y = x @ W + b), bf16
    wbd_ref : [H, G*D, G*D]  block-diagonal weight (G copies of W), bf16
    b_ref   : [H, 1, D]      bias, f32
    bbd_ref : [H, 1, G*D]    bias tiled G times, f32
    out_ref : [TB, D]        final item representation (hop-0 activation)
    """
    f32 = jnp.float32
    n = [S ** h for h in range(H + 1)]           # nodes per hop (per row)
    eoff = [sum(n[:h]) for h in range(H + 1)]    # node offsets into ent_ref
    roff = [sum(n[1:h + 1]) for h in range(H)]   # edge offsets into rel_ref
    inv_d = 1.0 / D

    u = u_ref[...].astype(f32)                   # [TB, D]
    ent = ent_ref[...].astype(f32)               # [TB, NT*D]
    rel = rel_ref[...].astype(f32)               # [TB, NR*D]
    x = [ent[:, eoff[h] * D:(eoff[h] + n[h]) * D] for h in range(H + 1)]
    r = [rel[:, roff[h] * D:(roff[h] + n[h + 1]) * D] for h in range(H)]

    for i in range(H):                           # GNN iterations (static)
        w = w_ref[i]                             # [D, D] bf16
        wbd = wbd_ref[i]                         # [G*D, G*D] bf16
        b = b_ref[i]                             # [1, D] f32
        bbd = bbd_ref[i]                         # [1, G*D] f32
        use_relu = i < H - 1
        new_x = []
        for h in range(H - i):                   # hops of this iteration
            sv, nb, rl = x[h], x[h + 1], r[h]
            # --- softmax(user . relation) weighted neighbor mean, per node ---
            agg = []
            for k in range(n[h]):
                scores = []
                for s in range(S):
                    o = (k * S + s) * D
                    scores.append(
                        jnp.sum(rl[:, o:o + D] * u, axis=-1, keepdims=True)
                        * inv_d)
                m = scores[0]
                for s in range(1, S):
                    m = jnp.maximum(m, scores[s])
                e = [jnp.exp(sc - m) for sc in scores]
                den = e[0]
                for s in range(1, S):
                    den = den + e[s]
                # EUP reciprocal; 1/S (torch.mean over neighbors) folded in.
                inv_den = pl.reciprocal(den * float(S), approx=True)
                o0 = k * S * D
                acc = e[0] * nb[:, o0:o0 + D]
                for s in range(1, S):
                    o = (k * S + s) * D
                    acc = acc + e[s] * nb[:, o:o + D]
                agg.append(acc * inv_den)        # [TB, D]
            # --- (self + agg) @ W + b, then activation ----------------------
            outs = []
            if n[h] >= G and n[h] % G == 0:
                # block-diag weight: G nodes per [TB,G*D] @ [G*D,G*D] MXU pass
                for g0 in range(0, n[h], G):
                    pre = sv[:, g0 * D:(g0 + G) * D] + jnp.concatenate(
                        agg[g0:g0 + G], axis=-1)
                    outs.append(jnp.dot(pre.astype(jnp.bfloat16), wbd,
                                        preferred_element_type=f32) + bbd)
            else:
                for k in range(n[h]):
                    pre = sv[:, k * D:(k + 1) * D] + agg[k]
                    outs.append(jnp.dot(pre.astype(jnp.bfloat16), w,
                                        preferred_element_type=f32) + b)
            res = jnp.concatenate(outs, axis=-1) if len(outs) > 1 else outs[0]
            res = jnp.maximum(res, 0.0) if use_relu else jnp.tanh(res)
            new_x.append(res)                    # [TB, n[h]*D], stays in vregs
        x = new_x
    out_ref[...] = x[0].astype(out_ref.dtype)


def _fused_forward_call(u_emb, ent_vec, rel_vec, w_all, wbd_all, b_all,
                        bbd_all, *, D, S, H, TB):
    Bp = u_emb.shape[0]
    NT = ent_vec.shape[1] // D
    NR = rel_vec.shape[1] // D
    G = wbd_all.shape[1] // D
    kernel = functools.partial(_student_kernel, D=D, S=S, H=H, G=G)
    return pl.pallas_call(
        kernel,
        out_shape=jax.ShapeDtypeStruct((Bp, D), jnp.float32),
        grid=(Bp // TB,),
        in_specs=[
            pl.BlockSpec((TB, D), lambda b: (b, 0)),            # user emb
            pl.BlockSpec((TB, NT * D), lambda b: (b, 0)),       # entity emb
            pl.BlockSpec((TB, NR * D), lambda b: (b, 0)),       # relation emb
            pl.BlockSpec((H, D, D), lambda b: (0, 0, 0)),       # W (resident)
            pl.BlockSpec((H, G * D, G * D), lambda b: (0, 0, 0)),
            pl.BlockSpec((H, 1, D), lambda b: (0, 0, 0)),
            pl.BlockSpec((H, 1, G * D), lambda b: (0, 0, 0)),
        ],
        out_specs=pl.BlockSpec((TB, D), lambda b: (b, 0)),
        compiler_params=pltpu.CompilerParams(
            dimension_semantics=("parallel",)),
    )(u_emb, ent_vec, rel_vec, w_all, wbd_all, b_all, bbd_all)


# ----------------------------------------------------------------------------
# KGPLStudent in JAX (glue) + KGPLCOT wrapper
# ----------------------------------------------------------------------------

def init_student(key, n_user, n_entity, n_relation, D, n_iter,
                 emb_dtype=EMB_DTYPE):
    """Deterministic parameter init (synthetic; not a checkpoint load)."""
    ks = jax.random.split(key, 3 + 2 * n_iter)
    params = {
        "user_emb": (0.1 * jax.random.normal(ks[0], (n_user, D))).astype(emb_dtype),
        "entity_emb": (0.1 * jax.random.normal(ks[1], (n_entity, D))).astype(emb_dtype),
        "relation_emb": (0.1 * jax.random.normal(ks[2], (n_relation, D))).astype(emb_dtype),
        "agg_W": [],
        "agg_b": [],
    }
    bound = 1.0 / (D ** 0.5)
    for i in range(n_iter):
        # stored as [in, out]: y = x @ W + b  (== torch nn.Linear weight.T)
        params["agg_W"].append(
            jax.random.uniform(ks[3 + 2 * i], (D, D), jnp.float32, -bound, bound))
        params["agg_b"].append(
            jax.random.uniform(ks[4 + 2 * i], (D,), jnp.float32, -bound, bound))
    return params


def get_neighbors(item_indices, adj_entity, adj_relation, n_iter):
    B = item_indices.shape[0]
    entities = [item_indices.reshape(B, 1)]
    relations = []
    for _ in range(n_iter):
        neigh_e = adj_entity[entities[-1]].reshape(B, -1)
        neigh_r = adj_relation[entities[-1]].reshape(B, -1)
        entities.append(neigh_e)
        relations.append(neigh_r)
    return entities, relations


def student_forward(params, cfg, adj_entity, adj_relation,
                    user_indices, item_indices):
    """KGPLStudent.forward (eval mode: dropout = identity)."""
    B = user_indices.shape[0]
    D = cfg["emb_dim"]
    S = cfg["neighbor_sample_size"]
    H = cfg["n_iter"]

    entities, relations = get_neighbors(item_indices, adj_entity,
                                        adj_relation, H)
    # Concatenate / pad the (tiny) INDEX arrays before the gather so the
    # embedding data lands directly in the fused lane-dense layout.
    ent_idx = jnp.concatenate(entities, axis=1)         # [B, NT] int32
    rel_idx = jnp.concatenate(relations, axis=1)        # [B, NR] int32
    NT, NR = ent_idx.shape[1], rel_idx.shape[1]

    row_bytes = (NT + NR + 1) * D * jnp.dtype(EMB_DTYPE).itemsize
    TB, Bp = _choose_batch_tile(B, row_bytes)
    pad = Bp - B
    u_idx = user_indices
    if pad:
        u_idx = jnp.pad(u_idx, (0, pad))
        ent_idx = jnp.pad(ent_idx, ((0, pad), (0, 0)))
        rel_idx = jnp.pad(rel_idx, ((0, pad), (0, 0)))

    u_emb = params["user_emb"][u_idx]                               # [Bp, D]
    ent_vec = params["entity_emb"][ent_idx].reshape(Bp, NT * D)     # [Bp, NT*D]
    rel_vec = params["relation_emb"][rel_idx].reshape(Bp, NR * D)   # [Bp, NR*D]

    G = max(1, 128 // D)
    eye = jnp.eye(G, dtype=jnp.float32)
    w_f32 = [w.astype(jnp.float32) for w in params["agg_W"]]
    w_all = jnp.stack(w_f32).astype(jnp.bfloat16)                   # [H, D, D]
    wbd_all = jnp.stack([jnp.kron(eye, w) for w in w_f32]).astype(jnp.bfloat16)
    b_all = jnp.stack(params["agg_b"]).reshape(H, 1, D).astype(jnp.float32)
    bbd_all = jnp.tile(b_all, (1, 1, G))

    item_repr = _fused_forward_call(u_emb, ent_vec, rel_vec,
                                    w_all, wbd_all, b_all, bbd_all,
                                    D=D, S=S, H=H, TB=TB)[:B]
    # matches torch `x[0].squeeze()` for B > 1; final dot in plain JAX (fused)
    return jnp.sum(u_emb[:B].astype(jnp.float32) * item_repr, axis=-1)


def student_forward_ref(params, cfg, adj_entity, adj_relation,
                        user_indices, item_indices):
    """Pure-jnp reference mirroring the torch forward (eval mode)."""
    B = user_indices.shape[0]
    D, S, H = cfg["emb_dim"], cfg["neighbor_sample_size"], cfg["n_iter"]
    f32 = jnp.float32
    u = params["user_emb"][user_indices].astype(f32)
    entities, relations = get_neighbors(item_indices, adj_entity,
                                        adj_relation, H)
    x = [params["entity_emb"][e].astype(f32) for e in entities]
    rels = [params["relation_emb"][r].astype(f32) for r in relations]
    for i in range(H):
        # match the kernel's bf16-stored weights
        W = params["agg_W"][i].astype(jnp.bfloat16).astype(f32)
        b = params["agg_b"][i].astype(f32)
        nxt = []
        for h in range(H - i):
            sv = x[h]
            nb = x[h + 1].reshape(B, -1, S, D)
            rl = rels[h].reshape(B, -1, S, D)
            scores = jnp.mean(u[:, None, None, :] * rl, axis=-1)     # [B,n,S]
            wts = jax.nn.softmax(scores, axis=-1)[..., None]
            agg = jnp.mean(wts * nb, axis=2)                         # [B,n,D]
            out = (sv + agg) @ W + b
            out = jnp.maximum(out, 0.0) if i < H - 1 else jnp.tanh(out)
            nxt.append(out)
        x = nxt
    item_repr = x[0].reshape(B, D)
    return jnp.sum(u * item_repr, axis=-1)


class KGPLCOT:
    """Two student models (f and g); evaluate() runs the student forward."""

    def __init__(self, cfg, n_user, n_entity, n_relation,
                 adj_entity, adj_relation, seed=0):
        self.cfg = cfg
        self.adj_entity = adj_entity
        self.adj_relation = adj_relation
        kf, kg = jax.random.split(jax.random.PRNGKey(seed))
        self.params_f = init_student(kf, n_user, n_entity, n_relation,
                                     cfg["emb_dim"], cfg["n_iter"])
        self.params_g = init_student(kg, n_user, n_entity, n_relation,
                                     cfg["emb_dim"], cfg["n_iter"])
        cfg_c, adj_e, adj_r = self.cfg, self.adj_entity, self.adj_relation
        self._fwd = jax.jit(
            lambda p, u, it: jax.nn.sigmoid(
                student_forward(p, cfg_c, adj_e, adj_r, u, it)))

    def evaluate(self, model_name, users, items):
        params = self.params_f if model_name == "f" else self.params_g
        return self._fwd(params, users, items)


# ----------------------------------------------------------------------------
# main
# ----------------------------------------------------------------------------

if __name__ == "__main__":
    cfg = {"emb_dim": 32, "n_iter": 2, "neighbor_sample_size": 4}
    n_user, n_item, n_entity, n_relation = 10, 12, 20, 5
    B = 2

    key = jax.random.PRNGKey(0)
    k1, k2, k3, k4 = jax.random.split(key, 4)
    adj_entity = jax.random.randint(
        k1, (n_entity, cfg["neighbor_sample_size"]), 0, n_entity)
    adj_relation = jax.random.randint(
        k2, (n_entity, cfg["neighbor_sample_size"]), 0, n_relation)
    users = jax.random.randint(k3, (B,), 0, n_user)
    items = jax.random.randint(k4, (B,), 0, n_item)

    model = KGPLCOT(cfg, n_user, n_entity, n_relation,
                    adj_entity, adj_relation, seed=0)
    scores_f = model.evaluate("f", users, items)
    scores_g = model.evaluate("g", users, items)
    jax.block_until_ready((scores_f, scores_g))

    assert scores_f.shape == (B,) and scores_g.shape == (B,)
    assert bool(jnp.all(jnp.isfinite(scores_f)))
    assert bool(jnp.all(jnp.isfinite(scores_g)))

    # Tolerance-based parity vs. pure-JAX reference (bf16 storage / matmul
    # operands + approx reciprocal => small, bounded differences).
    ref_f = jax.nn.sigmoid(student_forward_ref(
        model.params_f, cfg, adj_entity, adj_relation, users, items))
    assert float(jnp.max(jnp.abs(scores_f - ref_f))) < 5e-2

    print("KERNEL_OK")
</pallas_src>

<mosaic_0001>
module attributes {stable_mosaic.version = 11 : i64} {
  func.func @_student_kernel(%arg0: i32, %arg1: memref<8x32xbf16, #tpu.memory_space<vmem>>, %arg2: memref<8x672xbf16, #tpu.memory_space<vmem>>, %arg3: memref<8x640xbf16, #tpu.memory_space<vmem>>, %arg4: memref<2x32x32xbf16, #tpu.memory_space<vmem>>, %arg5: memref<2x128x128xbf16, #tpu.memory_space<vmem>>, %arg6: memref<2x1x32xf32, #tpu.memory_space<vmem>>, %arg7: memref<2x1x128xf32, #tpu.memory_space<vmem>>, %arg8: memref<8x32xf32, #tpu.memory_space<vmem>>) attributes {dimension_semantics = [#tpu.dimension_semantics<parallel>], iteration_bounds = array<i64: 1>, scalar_prefetch = 0 : i64, scratch_operands = 0 : i64, tpu.core_type = #tpu.core_type<tc>, window_params = [{transform_indices = @transform_0, window_bounds = array<i64: 8, 32>}, {transform_indices = @transform_1, window_bounds = array<i64: 8, 672>}, {transform_indices = @transform_2, window_bounds = array<i64: 8, 640>}, {pipeline_mode = #tpu.pipeline_mode<synchronous>, transform_indices = @transform_3, window_bounds = array<i64: 2, 32, 32>}, {pipeline_mode = #tpu.pipeline_mode<synchronous>, transform_indices = @transform_4, window_bounds = array<i64: 2, 128, 128>}, {pipeline_mode = #tpu.pipeline_mode<synchronous>, transform_indices = @transform_5, window_bounds = array<i64: 2, 1, 32>}, {pipeline_mode = #tpu.pipeline_mode<synchronous>, transform_indices = @transform_6, window_bounds = array<i64: 2, 1, 128>}, {transform_indices = @transform_7, window_bounds = array<i64: 8, 32>}]} {
    %c0 = arith.constant 0 : index
    %c0_0 = arith.constant 0 : index
    %0 = vector.load %arg1[%c0, %c0_0] : memref<8x32xbf16, #tpu.memory_space<vmem>>, vector<8x32xbf16>
    %1 = arith.extf %0 : vector<8x32xbf16> to vector<8x32xf32>
    %c0_1 = arith.constant 0 : index
    %c0_2 = arith.constant 0 : index
    %2 = vector.load %arg2[%c0_1, %c0_2] : memref<8x672xbf16, #tpu.memory_space<vmem>>, vector<8x672xbf16>
    %3 = arith.extf %2 : vector<8x672xbf16> to vector<8x672xf32>
    %c0_3 = arith.constant 0 : index
    %c0_4 = arith.constant 0 : index
    %4 = vector.load %arg3[%c0_3, %c0_4] : memref<8x640xbf16, #tpu.memory_space<vmem>>, vector<8x640xbf16>
    %5 = arith.extf %4 : vector<8x640xbf16> to vector<8x640xf32>
    %6 = vector.extract_strided_slice %3 {offsets = [0, 0], sizes = [8, 32], strides = [1, 1]} : vector<8x672xf32> to vector<8x32xf32>
    %7 = vector.extract_strided_slice %3 {offsets = [0, 32], sizes = [8, 128], strides = [1, 1]} : vector<8x672xf32> to vector<8x128xf32>
    %8 = vector.extract_strided_slice %3 {offsets = [0, 160], sizes = [8, 512], strides = [1, 1]} : vector<8x672xf32> to vector<8x512xf32>
    %9 = vector.extract_strided_slice %5 {offsets = [0, 0], sizes = [8, 128], strides = [1, 1]} : vector<8x640xf32> to vector<8x128xf32>
    %10 = vector.extract_strided_slice %5 {offsets = [0, 128], sizes = [8, 512], strides = [1, 1]} : vector<8x640xf32> to vector<8x512xf32>
    %c0_5 = arith.constant 0 : index
    %c0_6 = arith.constant 0 : index
    %c0_7 = arith.constant 0 : index
    %11 = vector.load %arg4[%c0_5, %c0_6, %c0_7] : memref<2x32x32xbf16, #tpu.memory_space<vmem>>, vector<1x32x32xbf16>
    %12 = vector.shape_cast %11 : vector<1x32x32xbf16> to vector<32x32xbf16>
    %c0_8 = arith.constant 0 : index
    %c0_9 = arith.constant 0 : index
    %c0_10 = arith.constant 0 : index
    %13 = vector.load %arg5[%c0_8, %c0_9, %c0_10] : memref<2x128x128xbf16, #tpu.memory_space<vmem>>, vector<1x128x128xbf16>
    %14 = vector.shape_cast %13 : vector<1x128x128xbf16> to vector<128x128xbf16>
    %c0_11 = arith.constant 0 : index
    %c0_12 = arith.constant 0 : index
    %c0_13 = arith.constant 0 : index
    %15 = vector.load %arg6[%c0_11, %c0_12, %c0_13] : memref<2x1x32xf32, #tpu.memory_space<vmem>>, vector<1x1x32xf32>
    %16 = vector.shape_cast %15 : vector<1x1x32xf32> to vector<1x32xf32>
    %c0_14 = arith.constant 0 : index
    %c0_15 = arith.constant 0 : index
    %c0_16 = arith.constant 0 : index
    %17 = vector.load %arg7[%c0_14, %c0_15, %c0_16] : memref<2x1x128xf32, #tpu.memory_space<vmem>>, vector<1x1x128xf32>
    %18 = vector.shape_cast %17 : vector<1x1x128xf32> to vector<1x128xf32>
    %19 = vector.extract_strided_slice %9 {offsets = [0, 0], sizes = [8, 32], strides = [1, 1]} : vector<8x128xf32> to vector<8x32xf32>
    %20 = arith.mulf %19, %1 : vector<8x32xf32>
    %cst = arith.constant dense<0.000000e+00> : vector<8xf32>
    %21 = vector.multi_reduction <add>, %20, %cst [1] : vector<8x32xf32> to vector<8xf32>
    %22 = vector.shape_cast %21 : vector<8xf32> to vector<8x1xf32>
    %cst_17 = arith.constant 3.125000e-02 : f32
    %23 = vector.broadcast %cst_17 : f32 to vector<8x1xf32>
    %24 = arith.mulf %22, %23 : vector<8x1xf32>
    %25 = vector.extract_strided_slice %9 {offsets = [0, 32], sizes = [8, 32], strides = [1, 1]} : vector<8x128xf32> to vector<8x32xf32>
    %26 = arith.mulf %25, %1 : vector<8x32xf32>
    %cst_18 = arith.constant dense<0.000000e+00> : vector<8xf32>
    %27 = vector.multi_reduction <add>, %26, %cst_18 [1] : vector<8x32xf32> to vector<8xf32>
    %28 = vector.shape_cast %27 : vector<8xf32> to vector<8x1xf32>
    %cst_19 = arith.constant 3.125000e-02 : f32
    %29 = vector.broadcast %cst_19 : f32 to vector<8x1xf32>
    %30 = arith.mulf %28, %29 : vector<8x1xf32>
    %31 = vector.extract_strided_slice %9 {offsets = [0, 64], sizes = [8, 32], strides = [1, 1]} : vector<8x128xf32> to vector<8x32xf32>
    %32 = arith.mulf %31, %1 : vector<8x32xf32>
    %cst_20 = arith.constant dense<0.000000e+00> : vector<8xf32>
    %33 = vector.multi_reduction <add>, %32, %cst_20 [1] : vector<8x32xf32> to vector<8xf32>
    %34 = vector.shape_cast %33 : vector<8xf32> to vector<8x1xf32>
    %cst_21 = arith.constant 3.125000e-02 : f32
    %35 = vector.broadcast %cst_21 : f32 to vector<8x1xf32>
    %36 = arith.mulf %34, %35 : vector<8x1xf32>
    %37 = vector.extract_strided_slice %9 {offsets = [0, 96], sizes = [8, 32], strides = [1, 1]} : vector<8x128xf32> to vector<8x32xf32>
    %38 = arith.mulf %37, %1 : vector<8x32xf32>
    %cst_22 = arith.constant dense<0.000000e+00> : vector<8xf32>
    %39 = vector.multi_reduction <add>, %38, %cst_22 [1] : vector<8x32xf32> to vector<8xf32>
    %40 = vector.shape_cast %39 : vector<8xf32> to vector<8x1xf32>
    %cst_23 = arith.constant 3.125000e-02 : f32
    %41 = vector.broadcast %cst_23 : f32 to vector<8x1xf32>
    %42 = arith.mulf %40, %41 : vector<8x1xf32>
    %43 = arith.maximumf %24, %30 : vector<8x1xf32>
    %44 = arith.maximumf %43, %36 : vector<8x1xf32>
    %45 = arith.maximumf %44, %42 : vector<8x1xf32>
    %46 = arith.subf %24, %45 : vector<8x1xf32>
    %47 = math.exp %46 : vector<8x1xf32>
    %48 = arith.subf %30, %45 : vector<8x1xf32>
    %49 = math.exp %48 : vector<8x1xf32>
    %50 = arith.subf %36, %45 : vector<8x1xf32>
    %51 = math.exp %50 : vector<8x1xf32>
    %52 = arith.subf %42, %45 : vector<8x1xf32>
    %53 = math.exp %52 : vector<8x1xf32>
    %54 = arith.addf %47, %49 : vector<8x1xf32>
    %55 = arith.addf %54, %51 : vector<8x1xf32>
    %56 = arith.addf %55, %53 : vector<8x1xf32>
    %cst_24 = arith.constant 4.000000e+00 : f32
    %57 = vector.broadcast %cst_24 : f32 to vector<8x1xf32>
    %58 = arith.mulf %56, %57 : vector<8x1xf32>
    %59 = tpu.reciprocal %58 {approx = true} : vector<8x1xf32> -> vector<8x1xf32>
    %60 = vector.extract_strided_slice %7 {offsets = [0, 0], sizes = [8, 32], strides = [1, 1]} : vector<8x128xf32> to vector<8x32xf32>
    %61 = vector.broadcast %47 : vector<8x1xf32> to vector<8x32xf32>
    %62 = arith.mulf %61, %60 : vector<8x32xf32>
    %63 = vector.extract_strided_slice %7 {offsets = [0, 32], sizes = [8, 32], strides = [1, 1]} : vector<8x128xf32> to vector<8x32xf32>
    %64 = vector.broadcast %49 : vector<8x1xf32> to vector<8x32xf32>
    %65 = arith.mulf %64, %63 : vector<8x32xf32>
    %66 = arith.addf %62, %65 : vector<8x32xf32>
    %67 = vector.extract_strided_slice %7 {offsets = [0, 64], sizes = [8, 32], strides = [1, 1]} : vector<8x128xf32> to vector<8x32xf32>
    %68 = vector.broadcast %51 : vector<8x1xf32> to vector<8x32xf32>
    %69 = arith.mulf %68, %67 : vector<8x32xf32>
    %70 = arith.addf %66, %69 : vector<8x32xf32>
    %71 = vector.extract_strided_slice %7 {offsets = [0, 96], sizes = [8, 32], strides = [1, 1]} : vector<8x128xf32> to vector<8x32xf32>
    %72 = vector.broadcast %53 : vector<8x1xf32> to vector<8x32xf32>
    %73 = arith.mulf %72, %71 : vector<8x32xf32>
    %74 = arith.addf %70, %73 : vector<8x32xf32>
    %75 = vector.broadcast %59 : vector<8x1xf32> to vector<8x32xf32>
    %76 = arith.mulf %74, %75 : vector<8x32xf32>
    %77 = arith.addf %6, %76 : vector<8x32xf32>
    %78 = arith.truncf %77 : vector<8x32xf32> to vector<8x32xbf16>
    %cst_25 = arith.constant dense<0.000000e+00> : vector<8x32xf32>
    %79 = tpu.matmul %78, %12, %cst_25 {dimension_numbers = #tpu.dot_dimension_numbers<[1], [0], [0], [1], [0, 0, 1, 1], [], []>} : vector<8x32xbf16>, vector<32x32xbf16>, vector<8x32xf32> -> vector<8x32xf32>
    %80 = vector.broadcast %16 : vector<1x32xf32> to vector<8x32xf32>
    %81 = arith.addf %79, %80 : vector<8x32xf32>
    %cst_26 = arith.constant 0.000000e+00 : f32
    %82 = vector.broadcast %cst_26 : f32 to vector<8x32xf32>
    %83 = arith.maximumf %81, %82 : vector<8x32xf32>
    %84 = vector.extract_strided_slice %10 {offsets = [0, 0], sizes = [8, 32], strides = [1, 1]} : vector<8x512xf32> to vector<8x32xf32>
    %85 = arith.mulf %84, %1 : vector<8x32xf32>
    %cst_27 = arith.constant dense<0.000000e+00> : vector<8xf32>
    %86 = vector.multi_reduction <add>, %85, %cst_27 [1] : vector<8x32xf32> to vector<8xf32>
    %87 = vector.shape_cast %86 : vector<8xf32> to vector<8x1xf32>
    %cst_28 = arith.constant 3.125000e-02 : f32
    %88 = vector.broadcast %cst_28 : f32 to vector<8x1xf32>
    %89 = arith.mulf %87, %88 : vector<8x1xf32>
    %90 = vector.extract_strided_slice %10 {offsets = [0, 32], sizes = [8, 32], strides = [1, 1]} : vector<8x512xf32> to vector<8x32xf32>
    %91 = arith.mulf %90, %1 : vector<8x32xf32>
    %cst_29 = arith.constant dense<0.000000e+00> : vector<8xf32>
    %92 = vector.multi_reduction <add>, %91, %cst_29 [1] : vector<8x32xf32> to vector<8xf32>
    %93 = vector.shape_cast %92 : vector<8xf32> to vector<8x1xf32>
    %cst_30 = arith.constant 3.125000e-02 : f32
    %94 = vector.broadcast %cst_30 : f32 to vector<8x1xf32>
    %95 = arith.mulf %93, %94 : vector<8x1xf32>
    %96 = vector.extract_strided_slice %10 {offsets = [0, 64], sizes = [8, 32], strides = [1, 1]} : vector<8x512xf32> to vector<8x32xf32>
    %97 = arith.mulf %96, %1 : vector<8x32xf32>
    %cst_31 = arith.constant dense<0.000000e+00> : vector<8xf32>
    %98 = vector.multi_reduction <add>, %97, %cst_31 [1] : vector<8x32xf32> to vector<8xf32>
    %99 = vector.shape_cast %98 : vector<8xf32> to vector<8x1xf32>
    %cst_32 = arith.constant 3.125000e-02 : f32
    %100 = vector.broadcast %cst_32 : f32 to vector<8x1xf32>
    %101 = arith.mulf %99, %100 : vector<8x1xf32>
    %102 = vector.extract_strided_slice %10 {offsets = [0, 96], sizes = [8, 32], strides = [1, 1]} : vector<8x512xf32> to vector<8x32xf32>
    %103 = arith.mulf %102, %1 : vector<8x32xf32>
    %cst_33 = arith.constant dense<0.000000e+00> : vector<8xf32>
    %104 = vector.multi_reduction <add>, %103, %cst_33 [1] : vector<8x32xf32> to vector<8xf32>
    %105 = vector.shape_cast %104 : vector<8xf32> to vector<8x1xf32>
    %cst_34 = arith.constant 3.125000e-02 : f32
    %106 = vector.broadcast %cst_34 : f32 to vector<8x1xf32>
    %107 = arith.mulf %105, %106 : vector<8x1xf32>
    %108 = arith.maximumf %89, %95 : vector<8x1xf32>
    %109 = arith.maximumf %108, %101 : vector<8x1xf32>
    %110 = arith.maximumf %109, %107 : vector<8x1xf32>
    %111 = arith.subf %89, %110 : vector<8x1xf32>
    %112 = math.exp %111 : vector<8x1xf32>
    %113 = arith.subf %95, %110 : vector<8x1xf32>
    %114 = math.exp %113 : vector<8x1xf32>
    %115 = arith.subf %101, %110 : vector<8x1xf32>
    %116 = math.exp %115 : vector<8x1xf32>
    %117 = arith.subf %107, %110 : vector<8x1xf32>
    %118 = math.exp %117 : vector<8x1xf32>
    %119 = arith.addf %112, %114 : vector<8x1xf32>
    %120 = arith.addf %119, %116 : vector<8x1xf32>
    %121 = arith.addf %120, %118 : vector<8x1xf32>
    %cst_35 = arith.constant 4.000000e+00 : f32
    %122 = vector.broadcast %cst_35 : f32 to vector<8x1xf32>
    %123 = arith.mulf %121, %122 : vector<8x1xf32>
    %124 = tpu.reciprocal %123 {approx = true} : vector<8x1xf32> -> vector<8x1xf32>
    %125 = vector.extract_strided_slice %8 {offsets = [0, 0], sizes = [8, 32], strides = [1, 1]} : vector<8x512xf32> to vector<8x32xf32>
    %126 = vector.broadcast %112 : vector<8x1xf32> to vector<8x32xf32>
    %127 = arith.mulf %126, %125 : vector<8x32xf32>
    %128 = vector.extract_strided_slice %8 {offsets = [0, 32], sizes = [8, 32], strides = [1, 1]} : vector<8x512xf32> to vector<8x32xf32>
    %129 = vector.broadcast %114 : vector<8x1xf32> to vector<8x32xf32>
    %130 = arith.mulf %129, %128 : vector<8x32xf32>
    %131 = arith.addf %127, %130 : vector<8x32xf32>
    %132 = vector.extract_strided_slice %8 {offsets = [0, 64], sizes = [8, 32], strides = [1, 1]} : vector<8x512xf32> to vector<8x32xf32>
    %133 = vector.broadcast %116 : vector<8x1xf32> to vector<8x32xf32>
    %134 = arith.mulf %133, %132 : vector<8x32xf32>
    %135 = arith.addf %131, %134 : vector<8x32xf32>
    %136 = vector.extract_strided_slice %8 {offsets = [0, 96], sizes = [8, 32], strides = [1, 1]} : vector<8x512xf32> to vector<8x32xf32>
    %137 = vector.broadcast %118 : vector<8x1xf32> to vector<8x32xf32>
    %138 = arith.mulf %137, %136 : vector<8x32xf32>
    %139 = arith.addf %135, %138 : vector<8x32xf32>
    %140 = vector.broadcast %124 : vector<8x1xf32> to vector<8x32xf32>
    %141 = arith.mulf %139, %140 : vector<8x32xf32>
    %142 = vector.extract_strided_slice %10 {offsets = [0, 128], sizes = [8, 32], strides = [1, 1]} : vector<8x512xf32> to vector<8x32xf32>
    %143 = arith.mulf %142, %1 : vector<8x32xf32>
    %cst_36 = arith.constant dense<0.000000e+00> : vector<8xf32>
    %144 = vector.multi_reduction <add>, %143, %cst_36 [1] : vector<8x32xf32> to vector<8xf32>
    %145 = vector.shape_cast %144 : vector<8xf32> to vector<8x1xf32>
    %cst_37 = arith.constant 3.125000e-02 : f32
    %146 = vector.broadcast %cst_37 : f32 to vector<8x1xf32>
    %147 = arith.mulf %145, %146 : vector<8x1xf32>
    %148 = vector.extract_strided_slice %10 {offsets = [0, 160], sizes = [8, 32], strides = [1, 1]} : vector<8x512xf32> to vector<8x32xf32>
    %149 = arith.mulf %148, %1 : vector<8x32xf32>
    %cst_38 = arith.constant dense<0.000000e+00> : vector<8xf32>
    %150 = vector.multi_reduction <add>, %149, %cst_38 [1] : vector<8x32xf32> to vector<8xf32>
    %151 = vector.shape_cast %150 : vector<8xf32> to vector<8x1xf32>
    %cst_39 = arith.constant 3.125000e-02 : f32
    %152 = vector.broadcast %cst_39 : f32 to vector<8x1xf32>
    %153 = arith.mulf %151, %152 : vector<8x1xf32>
    %154 = vector.extract_strided_slice %10 {offsets = [0, 192], sizes = [8, 32], strides = [1, 1]} : vector<8x512xf32> to vector<8x32xf32>
    %155 = arith.mulf %154, %1 : vector<8x32xf32>
    %cst_40 = arith.constant dense<0.000000e+00> : vector<8xf32>
    %156 = vector.multi_reduction <add>, %155, %cst_40 [1] : vector<8x32xf32> to vector<8xf32>
    %157 = vector.shape_cast %156 : vector<8xf32> to vector<8x1xf32>
    %cst_41 = arith.constant 3.125000e-02 : f32
    %158 = vector.broadcast %cst_41 : f32 to vector<8x1xf32>
    %159 = arith.mulf %157, %158 : vector<8x1xf32>
    %160 = vector.extract_strided_slice %10 {offsets = [0, 224], sizes = [8, 32], strides = [1, 1]} : vector<8x512xf32> to vector<8x32xf32>
    %161 = arith.mulf %160, %1 : vector<8x32xf32>
    %cst_42 = arith.constant dense<0.000000e+00> : vector<8xf32>
    %162 = vector.multi_reduction <add>, %161, %cst_42 [1] : vector<8x32xf32> to vector<8xf32>
    %163 = vector.shape_cast %162 : vector<8xf32> to vector<8x1xf32>
    %cst_43 = arith.constant 3.125000e-02 : f32
    %164 = vector.broadcast %cst_43 : f32 to vector<8x1xf32>
    %165 = arith.mulf %163, %164 : vector<8x1xf32>
    %166 = arith.maximumf %147, %153 : vector<8x1xf32>
    %167 = arith.maximumf %166, %159 : vector<8x1xf32>
    %168 = arith.maximumf %167, %165 : vector<8x1xf32>
    %169 = arith.subf %147, %168 : vector<8x1xf32>
    %170 = math.exp %169 : vector<8x1xf32>
    %171 = arith.subf %153, %168 : vector<8x1xf32>
    %172 = math.exp %171 : vector<8x1xf32>
    %173 = arith.subf %159, %168 : vector<8x1xf32>
    %174 = math.exp %173 : vector<8x1xf32>
    %175 = arith.subf %165, %168 : vector<8x1xf32>
    %176 = math.exp %175 : vector<8x1xf32>
    %177 = arith.addf %170, %172 : vector<8x1xf32>
    %178 = arith.addf %177, %174 : vector<8x1xf32>
    %179 = arith.addf %178, %176 : vector<8x1xf32>
    %cst_44 = arith.constant 4.000000e+00 : f32
    %180 = vector.broadcast %cst_44 : f32 to vector<8x1xf32>
    %181 = arith.mulf %179, %180 : vector<8x1xf32>
    %182 = tpu.reciprocal %181 {approx = true} : vector<8x1xf32> -> vector<8x1xf32>
    %183 = vector.extract_strided_slice %8 {offsets = [0, 128], sizes = [8, 32], strides = [1, 1]} : vector<8x512xf32> to vector<8x32xf32>
    %184 = vector.broadcast %170 : vector<8x1xf32> to vector<8x32xf32>
    %185 = arith.mulf %184, %183 : vector<8x32xf32>
    %186 = vector.extract_strided_slice %8 {offsets = [0, 160], sizes = [8, 32], strides = [1, 1]} : vector<8x512xf32> to vector<8x32xf32>
    %187 = vector.broadcast %172 : vector<8x1xf32> to vector<8x32xf32>
    %188 = arith.mulf %187, %186 : vector<8x32xf32>
    %189 = arith.addf %185, %188 : vector<8x32xf32>
    %190 = vector.extract_strided_slice %8 {offsets = [0, 192], sizes = [8, 32], strides = [1, 1]} : vector<8x512xf32> to vector<8x32xf32>
    %191 = vector.broadcast %174 : vector<8x1xf32> to vector<8x32xf32>
    %192 = arith.mulf %191, %190 : vector<8x32xf32>
    %193 = arith.addf %189, %192 : vector<8x32xf32>
    %194 = vector.extract_strided_slice %8 {offsets = [0, 224], sizes = [8, 32], strides = [1, 1]} : vector<8x512xf32> to vector<8x32xf32>
    %195 = vector.broadcast %176 : vector<8x1xf32> to vector<8x32xf32>
    %196 = arith.mulf %195, %194 : vector<8x32xf32>
    %197 = arith.addf %193, %196 : vector<8x32xf32>
    %198 = vector.broadcast %182 : vector<8x1xf32> to vector<8x32xf32>
    %199 = arith.mulf %197, %198 : vector<8x32xf32>
    %200 = vector.extract_strided_slice %10 {offsets = [0, 256], sizes = [8, 32], strides = [1, 1]} : vector<8x512xf32> to vector<8x32xf32>
    %201 = arith.mulf %200, %1 : vector<8x32xf32>
    %cst_45 = arith.constant dense<0.000000e+00> : vector<8xf32>
    %202 = vector.multi_reduction <add>, %201, %cst_45 [1] : vector<8x32xf32> to vector<8xf32>
    %203 = vector.shape_cast %202 : vector<8xf32> to vector<8x1xf32>
    %cst_46 = arith.constant 3.125000e-02 : f32
    %204 = vector.broadcast %cst_46 : f32 to vector<8x1xf32>
    %205 = arith.mulf %203, %204 : vector<8x1xf32>
    %206 = vector.extract_strided_slice %10 {offsets = [0, 288], sizes = [8, 32], strides = [1, 1]} : vector<8x512xf32> to vector<8x32xf32>
    %207 = arith.mulf %206, %1 : vector<8x32xf32>
    %cst_47 = arith.constant dense<0.000000e+00> : vector<8xf32>
    %208 = vector.multi_reduction <add>, %207, %cst_47 [1] : vector<8x32xf32> to vector<8xf32>
    %209 = vector.shape_cast %208 : vector<8xf32> to vector<8x1xf32>
    %cst_48 = arith.constant 3.125000e-02 : f32
    %210 = vector.broadcast %cst_48 : f32 to vector<8x1xf32>
    %211 = arith.mulf %209, %210 : vector<8x1xf32>
    %212 = vector.extract_strided_slice %10 {offsets = [0, 320], sizes = [8, 32], strides = [1, 1]} : vector<8x512xf32> to vector<8x32xf32>
    %213 = arith.mulf %212, %1 : vector<8x32xf32>
    %cst_49 = arith.constant dense<0.000000e+00> : vector<8xf32>
    %214 = vector.multi_reduction <add>, %213, %cst_49 [1] : vector<8x32xf32> to vector<8xf32>
    %215 = vector.shape_cast %214 : vector<8xf32> to vector<8x1xf32>
    %cst_50 = arith.constant 3.125000e-02 : f32
    %216 = vector.broadcast %cst_50 : f32 to vector<8x1xf32>
    %217 = arith.mulf %215, %216 : vector<8x1xf32>
    %218 = vector.extract_strided_slice %10 {offsets = [0, 352], sizes = [8, 32], strides = [1, 1]} : vector<8x512xf32> to vector<8x32xf32>
    %219 = arith.mulf %218, %1 : vector<8x32xf32>
    %cst_51 = arith.constant dense<0.000000e+00> : vector<8xf32>
    %220 = vector.multi_reduction <add>, %219, %cst_51 [1] : vector<8x32xf32> to vector<8xf32>
    %221 = vector.shape_cast %220 : vector<8xf32> to vector<8x1xf32>
    %cst_52 = arith.constant 3.125000e-02 : f32
    %222 = vector.broadcast %cst_52 : f32 to vector<8x1xf32>
    %223 = arith.mulf %221, %222 : vector<8x1xf32>
    %224 = arith.maximumf %205, %211 : vector<8x1xf32>
    %225 = arith.maximumf %224, %217 : vector<8x1xf32>
    %226 = arith.maximumf %225, %223 : vector<8x1xf32>
    %227 = arith.subf %205, %226 : vector<8x1xf32>
    %228 = math.exp %227 : vector<8x1xf32>
    %229 = arith.subf %211, %226 : vector<8x1xf32>
    %230 = math.exp %229 : vector<8x1xf32>
    %231 = arith.subf %217, %226 : vector<8x1xf32>
    %232 = math.exp %231 : vector<8x1xf32>
    %233 = arith.subf %223, %226 : vector<8x1xf32>
    %234 = math.exp %233 : vector<8x1xf32>
    %235 = arith.addf %228, %230 : vector<8x1xf32>
    %236 = arith.addf %235, %232 : vector<8x1xf32>
    %237 = arith.addf %236, %234 : vector<8x1xf32>
    %cst_53 = arith.constant 4.000000e+00 : f32
    %238 = vector.broadcast %cst_53 : f32 to vector<8x1xf32>
    %239 = arith.mulf %237, %238 : vector<8x1xf32>
    %240 = tpu.reciprocal %239 {approx = true} : vector<8x1xf32> -> vector<8x1xf32>
    %241 = vector.extract_strided_slice %8 {offsets = [0, 256], sizes = [8, 32], strides = [1, 1]} : vector<8x512xf32> to vector<8x32xf32>
    %242 = vector.broadcast %228 : vector<8x1xf32> to vector<8x32xf32>
    %243 = arith.mulf %242, %241 : vector<8x32xf32>
    %244 = vector.extract_strided_slice %8 {offsets = [0, 288], sizes = [8, 32], strides = [1, 1]} : vector<8x512xf32> to vector<8x32xf32>
    %245 = vector.broadcast %230 : vector<8x1xf32> to vector<8x32xf32>
    %246 = arith.mulf %245, %244 : vector<8x32xf32>
    %247 = arith.addf %243, %246 : vector<8x32xf32>
    %248 = vector.extract_strided_slice %8 {offsets = [0, 320], sizes = [8, 32], strides = [1, 1]} : vector<8x512xf32> to vector<8x32xf32>
    %249 = vector.broadcast %232 : vector<8x1xf32> to vector<8x32xf32>
    %250 = arith.mulf %249, %248 : vector<8x32xf32>
    %251 = arith.addf %247, %250 : vector<8x32xf32>
    %252 = vector.extract_strided_slice %8 {offsets = [0, 352], sizes = [8, 32], strides = [1, 1]} : vector<8x512xf32> to vector<8x32xf32>
    %253 = vector.broadcast %234 : vector<8x1xf32> to vector<8x32xf32>
    %254 = arith.mulf %253, %252 : vector<8x32xf32>
    %255 = arith.addf %251, %254 : vector<8x32xf32>
    %256 = vector.broadcast %240 : vector<8x1xf32> to vector<8x32xf32>
    %257 = arith.mulf %255, %256 : vector<8x32xf32>
    %258 = vector.extract_strided_slice %10 {offsets = [0, 384], sizes = [8, 32], strides = [1, 1]} : vector<8x512xf32> to vector<8x32xf32>
    %259 = arith.mulf %258, %1 : vector<8x32xf32>
    %cst_54 = arith.constant dense<0.000000e+00> : vector<8xf32>
    %260 = vector.multi_reduction <add>, %259, %cst_54 [1] : vector<8x32xf32> to vector<8xf32>
    %261 = vector.shape_cast %260 : vector<8xf32> to vector<8x1xf32>
    %cst_55 = arith.constant 3.125000e-02 : f32
    %262 = vector.broadcast %cst_55 : f32 to vector<8x1xf32>
    %263 = arith.mulf %261, %262 : vector<8x1xf32>
    %264 = vector.extract_strided_slice %10 {offsets = [0, 416], sizes = [8, 32], strides = [1, 1]} : vector<8x512xf32> to vector<8x32xf32>
    %265 = arith.mulf %264, %1 : vector<8x32xf32>
    %cst_56 = arith.constant dense<0.000000e+00> : vector<8xf32>
    %266 = vector.multi_reduction <add>, %265, %cst_56 [1] : vector<8x32xf32> to vector<8xf32>
    %267 = vector.shape_cast %266 : vector<8xf32> to vector<8x1xf32>
    %cst_57 = arith.constant 3.125000e-02 : f32
    %268 = vector.broadcast %cst_57 : f32 to vector<8x1xf32>
    %269 = arith.mulf %267, %268 : vector<8x1xf32>
    %270 = vector.extract_strided_slice %10 {offsets = [0, 448], sizes = [8, 32], strides = [1, 1]} : vector<8x512xf32> to vector<8x32xf32>
    %271 = arith.mulf %270, %1 : vector<8x32xf32>
    %cst_58 = arith.constant dense<0.000000e+00> : vector<8xf32>
    %272 = vector.multi_reduction <add>, %271, %cst_58 [1] : vector<8x32xf32> to vector<8xf32>
    %273 = vector.shape_cast %272 : vector<8xf32> to vector<8x1xf32>
    %cst_59 = arith.constant 3.125000e-02 : f32
    %274 = vector.broadcast %cst_59 : f32 to vector<8x1xf32>
    %275 = arith.mulf %273, %274 : vector<8x1xf32>
    %276 = vector.extract_strided_slice %10 {offsets = [0, 480], sizes = [8, 32], strides = [1, 1]} : vector<8x512xf32> to vector<8x32xf32>
    %277 = arith.mulf %276, %1 : vector<8x32xf32>
    %cst_60 = arith.constant dense<0.000000e+00> : vector<8xf32>
    %278 = vector.multi_reduction <add>, %277, %cst_60 [1] : vector<8x32xf32> to vector<8xf32>
    %279 = vector.shape_cast %278 : vector<8xf32> to vector<8x1xf32>
    %cst_61 = arith.constant 3.125000e-02 : f32
    %280 = vector.broadcast %cst_61 : f32 to vector<8x1xf32>
    %281 = arith.mulf %279, %280 : vector<8x1xf32>
    %282 = arith.maximumf %263, %269 : vector<8x1xf32>
    %283 = arith.maximumf %282, %275 : vector<8x1xf32>
    %284 = arith.maximumf %283, %281 : vector<8x1xf32>
    %285 = arith.subf %263, %284 : vector<8x1xf32>
    %286 = math.exp %285 : vector<8x1xf32>
    %287 = arith.subf %269, %284 : vector<8x1xf32>
    %288 = math.exp %287 : vector<8x1xf32>
    %289 = arith.subf %275, %284 : vector<8x1xf32>
    %290 = math.exp %289 : vector<8x1xf32>
    %291 = arith.subf %281, %284 : vector<8x1xf32>
    %292 = math.exp %291 : vector<8x1xf32>
    %293 = arith.addf %286, %288 : vector<8x1xf32>
    %294 = arith.addf %293, %290 : vector<8x1xf32>
    %295 = arith.addf %294, %292 : vector<8x1xf32>
    %cst_62 = arith.constant 4.000000e+00 : f32
    %296 = vector.broadcast %cst_62 : f32 to vector<8x1xf32>
    %297 = arith.mulf %295, %296 : vector<8x1xf32>
    %298 = tpu.reciprocal %297 {approx = true} : vector<8x1xf32> -> vector<8x1xf32>
    %299 = vector.extract_strided_slice %8 {offsets = [0, 384], sizes = [8, 32], strides = [1, 1]} : vector<8x512xf32> to vector<8x32xf32>
    %300 = vector.broadcast %286 : vector<8x1xf32> to vector<8x32xf32>
    %301 = arith.mulf %300, %299 : vector<8x32xf32>
    %302 = vector.extract_strided_slice %8 {offsets = [0, 416], sizes = [8, 32], strides = [1, 1]} : vector<8x512xf32> to vector<8x32xf32>
    %303 = vector.broadcast %288 : vector<8x1xf32> to vector<8x32xf32>
    %304 = arith.mulf %303, %302 : vector<8x32xf32>
    %305 = arith.addf %301, %304 : vector<8x32xf32>
    %306 = vector.extract_strided_slice %8 {offsets = [0, 448], sizes = [8, 32], strides = [1, 1]} : vector<8x512xf32> to vector<8x32xf32>
    %307 = vector.broadcast %290 : vector<8x1xf32> to vector<8x32xf32>
    %308 = arith.mulf %307, %306 : vector<8x32xf32>
    %309 = arith.addf %305, %308 : vector<8x32xf32>
    %310 = vector.extract_strided_slice %8 {offsets = [0, 480], sizes = [8, 32], strides = [1, 1]} : vector<8x512xf32> to vector<8x32xf32>
    %311 = vector.broadcast %292 : vector<8x1xf32> to vector<8x32xf32>
    %312 = arith.mulf %311, %310 : vector<8x32xf32>
    %313 = arith.addf %309, %312 : vector<8x32xf32>
    %314 = vector.broadcast %298 : vector<8x1xf32> to vector<8x32xf32>
    %315 = arith.mulf %313, %314 : vector<8x32xf32>
    %316 = tpu.concatenate %141, %199, %257, %315 in 1 : vector<8x32xf32>, vector<8x32xf32>, vector<8x32xf32>, vector<8x32xf32> -> vector<8x128xf32>
    %317 = arith.addf %7, %316 : vector<8x128xf32>
    %318 = arith.truncf %317 : vector<8x128xf32> to vector<8x128xbf16>
    %cst_63 = arith.constant dense<0.000000e+00> : vector<8x128xf32>
    %319 = tpu.matmul %318, %14, %cst_63 {dimension_numbers = #tpu.dot_dimension_numbers<[1], [0], [0], [1], [0, 0, 1, 1], [], []>} : vector<8x128xbf16>, vector<128x128xbf16>, vector<8x128xf32> -> vector<8x128xf32>
    %320 = vector.broadcast %18 : vector<1x128xf32> to vector<8x128xf32>
    %321 = arith.addf %319, %320 : vector<8x128xf32>
    %cst_64 = arith.constant 0.000000e+00 : f32
    %322 = vector.broadcast %cst_64 : f32 to vector<8x128xf32>
    %323 = arith.maximumf %321, %322 : vector<8x128xf32>
    %c1 = arith.constant 1 : index
    %c0_65 = arith.constant 0 : index
    %c0_66 = arith.constant 0 : index
    %324 = vector.load %arg4[%c1, %c0_65, %c0_66] : memref<2x32x32xbf16, #tpu.memory_space<vmem>>, vector<1x32x32xbf16>
    %325 = vector.shape_cast %324 : vector<1x32x32xbf16> to vector<32x32xbf16>
    %c1_67 = arith.constant 1 : index
    %c0_68 = arith.constant 0 : index
    %c0_69 = arith.constant 0 : index
    %326 = vector.load %arg6[%c1_67, %c0_68, %c0_69] : memref<2x1x32xf32, #tpu.memory_space<vmem>>, vector<1x1x32xf32>
    %327 = vector.shape_cast %326 : vector<1x1x32xf32> to vector<1x32xf32>
    %328 = vector.extract_strided_slice %9 {offsets = [0, 0], sizes = [8, 32], strides = [1, 1]} : vector<8x128xf32> to vector<8x32xf32>
    %329 = arith.mulf %328, %1 : vector<8x32xf32>
    %cst_70 = arith.constant dense<0.000000e+00> : vector<8xf32>
    %330 = vector.multi_reduction <add>, %329, %cst_70 [1] : vector<8x32xf32> to vector<8xf32>
    %331 = vector.shape_cast %330 : vector<8xf32> to vector<8x1xf32>
    %cst_71 = arith.constant 3.125000e-02 : f32
    %332 = vector.broadcast %cst_71 : f32 to vector<8x1xf32>
    %333 = arith.mulf %331, %332 : vector<8x1xf32>
    %334 = vector.extract_strided_slice %9 {offsets = [0, 32], sizes = [8, 32], strides = [1, 1]} : vector<8x128xf32> to vector<8x32xf32>
    %335 = arith.mulf %334, %1 : vector<8x32xf32>
    %cst_72 = arith.constant dense<0.000000e+00> : vector<8xf32>
    %336 = vector.multi_reduction <add>, %335, %cst_72 [1] : vector<8x32xf32> to vector<8xf32>
    %337 = vector.shape_cast %336 : vector<8xf32> to vector<8x1xf32>
    %cst_73 = arith.constant 3.125000e-02 : f32
    %338 = vector.broadcast %cst_73 : f32 to vector<8x1xf32>
    %339 = arith.mulf %337, %338 : vector<8x1xf32>
    %340 = vector.extract_strided_slice %9 {offsets = [0, 64], sizes = [8, 32], strides = [1, 1]} : vector<8x128xf32> to vector<8x32xf32>
    %341 = arith.mulf %340, %1 : vector<8x32xf32>
    %cst_74 = arith.constant dense<0.000000e+00> : vector<8xf32>
    %342 = vector.multi_reduction <add>, %341, %cst_74 [1] : vector<8x32xf32> to vector<8xf32>
    %343 = vector.shape_cast %342 : vector<8xf32> to vector<8x1xf32>
    %cst_75 = arith.constant 3.125000e-02 : f32
    %344 = vector.broadcast %cst_75 : f32 to vector<8x1xf32>
    %345 = arith.mulf %343, %344 : vector<8x1xf32>
    %346 = vector.extract_strided_slice %9 {offsets = [0, 96], sizes = [8, 32], strides = [1, 1]} : vector<8x128xf32> to vector<8x32xf32>
    %347 = arith.mulf %346, %1 : vector<8x32xf32>
    %cst_76 = arith.constant dense<0.000000e+00> : vector<8xf32>
    %348 = vector.multi_reduction <add>, %347, %cst_76 [1] : vector<8x32xf32> to vector<8xf32>
    %349 = vector.shape_cast %348 : vector<8xf32> to vector<8x1xf32>
    %cst_77 = arith.constant 3.125000e-02 : f32
    %350 = vector.broadcast %cst_77 : f32 to vector<8x1xf32>
    %351 = arith.mulf %349, %350 : vector<8x1xf32>
    %352 = arith.maximumf %333, %339 : vector<8x1xf32>
    %353 = arith.maximumf %352, %345 : vector<8x1xf32>
    %354 = arith.maximumf %353, %351 : vector<8x1xf32>
    %355 = arith.subf %333, %354 : vector<8x1xf32>
    %356 = math.exp %355 : vector<8x1xf32>
    %357 = arith.subf %339, %354 : vector<8x1xf32>
    %358 = math.exp %357 : vector<8x1xf32>
    %359 = arith.subf %345, %354 : vector<8x1xf32>
    %360 = math.exp %359 : vector<8x1xf32>
    %361 = arith.subf %351, %354 : vector<8x1xf32>
    %362 = math.exp %361 : vector<8x1xf32>
    %363 = arith.addf %356, %358 : vector<8x1xf32>
    %364 = arith.addf %363, %360 : vector<8x1xf32>
    %365 = arith.addf %364, %362 : vector<8x1xf32>
    %cst_78 = arith.constant 4.000000e+00 : f32
    %366 = vector.broadcast %cst_78 : f32 to vector<8x1xf32>
    %367 = arith.mulf %365, %366 : vector<8x1xf32>
    %368 = tpu.reciprocal %367 {approx = true} : vector<8x1xf32> -> vector<8x1xf32>
    %369 = vector.extract_strided_slice %323 {offsets = [0, 0], sizes = [8, 32], strides = [1, 1]} : vector<8x128xf32> to vector<8x32xf32>
    %370 = vector.broadcast %356 : vector<8x1xf32> to vector<8x32xf32>
    %371 = arith.mulf %370, %369 : vector<8x32xf32>
    %372 = vector.extract_strided_slice %323 {offsets = [0, 32], sizes = [8, 32], strides = [1, 1]} : vector<8x128xf32> to vector<8x32xf32>
    %373 = vector.broadcast %358 : vector<8x1xf32> to vector<8x32xf32>
    %374 = arith.mulf %373, %372 : vector<8x32xf32>
    %375 = arith.addf %371, %374 : vector<8x32xf32>
    %376 = vector.extract_strided_slice %323 {offsets = [0, 64], sizes = [8, 32], strides = [1, 1]} : vector<8x128xf32> to vector<8x32xf32>
    %377 = vector.broadcast %360 : vector<8x1xf32> to vector<8x32xf32>
    %378 = arith.mulf %377, %376 : vector<8x32xf32>
    %379 = arith.addf %375, %378 : vector<8x32xf32>
    %380 = vector.extract_strided_slice %323 {offsets = [0, 96], sizes = [8, 32], strides = [1, 1]} : vector<8x128xf32> to vector<8x32xf32>
    %381 = vector.broadcast %362 : vector<8x1xf32> to vector<8x32xf32>
    %382 = arith.mulf %381, %380 : vector<8x32xf32>
    %383 = arith.addf %379, %382 : vector<8x32xf32>
    %384 = vector.broadcast %368 : vector<8x1xf32> to vector<8x32xf32>
    %385 = arith.mulf %383, %384 : vector<8x32xf32>
    %386 = arith.addf %83, %385 : vector<8x32xf32>
    %387 = arith.truncf %386 : vector<8x32xf32> to vector<8x32xbf16>
    %cst_79 = arith.constant dense<0.000000e+00> : vector<8x32xf32>
    %388 = tpu.matmul %387, %325, %cst_79 {dimension_numbers = #tpu.dot_dimension_numbers<[1], [0], [0], [1], [0, 0, 1, 1], [], []>} : vector<8x32xbf16>, vector<32x32xbf16>, vector<8x32xf32> -> vector<8x32xf32>
    %389 = vector.broadcast %327 : vector<1x32xf32> to vector<8x32xf32>
    %390 = arith.addf %388, %389 : vector<8x32xf32>
    %391 = math.tanh %390 : vector<8x32xf32>
    %c0_80 = arith.constant 0 : index
    %c0_81 = arith.constant 0 : index
    %392 = vector.load %arg8[%c0_80, %c0_81] : memref<8x32xf32, #tpu.memory_space<vmem>>, vector<8x32xf32>
    tpu.vector_store %arg8[%c0_80, %c0_81], %391 {strides = array<i32>} : memref<8x32xf32, #tpu.memory_space<vmem>>, vector<8x32xf32>,
    return
  }
  func.func @transform_0(%arg0: i32) -> (i32, i32) {
    %c0_i32 = arith.constant 0 : i32
    %c0_i32_0 = arith.constant 0 : i32
    return %arg0, %c0_i32 : i32, i32
  }
  func.func @transform_1(%arg0: i32) -> (i32, i32) {
    %c0_i32 = arith.constant 0 : i32
    %c0_i32_0 = arith.constant 0 : i32
    return %arg0, %c0_i32 : i32, i32
  }
  func.func @transform_2(%arg0: i32) -> (i32, i32) {
    %c0_i32 = arith.constant 0 : i32
    %c0_i32_0 = arith.constant 0 : i32
    return %arg0, %c0_i32 : i32, i32
  }
  func.func @transform_3(%arg0: i32) -> (i32, i32, i32) {
    %c0_i32 = arith.constant 0 : i32
    %c0_i32_0 = arith.constant 0 : i32
    %c0_i32_1 = arith.constant 0 : i32
    %c0_i32_2 = arith.constant 0 : i32
    return %c0_i32, %c0_i32_0, %c0_i32_1 : i32, i32, i32
  }
  func.func @transform_4(%arg0: i32) -> (i32, i32, i32) {
    %c0_i32 = arith.constant 0 : i32
    %c0_i32_0 = arith.constant 0 : i32
    %c0_i32_1 = arith.constant 0 : i32
    %c0_i32_2 = arith.constant 0 : i32
    return %c0_i32, %c0_i32_0, %c0_i32_1 : i32, i32, i32
  }
  func.func @transform_5(%arg0: i32) -> (i32, i32, i32) {
    %c0_i32 = arith.constant 0 : i32
    %c0_i32_0 = arith.constant 0 : i32
    %c0_i32_1 = arith.constant 0 : i32
    %c0_i32_2 = arith.constant 0 : i32
    return %c0_i32, %c0_i32_0, %c0_i32_1 : i32, i32, i32
  }
  func.func @transform_6(%arg0: i32) -> (i32, i32, i32) {
    %c0_i32 = arith.constant 0 : i32
    %c0_i32_0 = arith.constant 0 : i32
    %c0_i32_1 = arith.constant 0 : i32
    %c0_i32_2 = arith.constant 0 : i32
    return %c0_i32, %c0_i32_0, %c0_i32_1 : i32, i32, i32
  }
  func.func @transform_7(%arg0: i32) -> (i32, i32) {
    %c0_i32 = arith.constant 0 : i32
    %c0_i32_0 = arith.constant 0 : i32
    return %arg0, %c0_i32 : i32, i32
  }
}

</mosaic_0001>

<llo_original>
// kernel: _lambda_.1
$region0: #{_lambda_.1}
  #allocation0 [shape = 'u32[]', space=smem, size = 0x4, offset = 0x4, fixed_abs, tag = 'smem constant byte address 0x4 - core index']
  #allocation1 [shape = 'u32[144,128]{1,0:T(1,128)}', space=vmem, size = 0x12000, scoped, tag = 'internal scratch']
  %s0 = inlined_call_operand.vmem [shape: bf16[8,32], index: 0, kind: input, shape index: {}]
  %s1 = inlined_call_operand.vmem [shape: bf16[8,672], index: 1, kind: input, shape index: {}]
  %s2 = inlined_call_operand.vmem [shape: bf16[8,640], index: 2, kind: input, shape index: {}]
  %s3 = inlined_call_operand.vmem [shape: bf16[2,32,32], index: 3, kind: input, shape index: {}]
  %s4 = inlined_call_operand.vmem [shape: bf16[2,128,128], index: 4, kind: input, shape index: {}]
  %s5 = inlined_call_operand.vmem [shape: f32[2,1,32], index: 5, kind: input, shape index: {}]
  %s6 = inlined_call_operand.vmem [shape: f32[2,1,128], index: 6, kind: input, shape index: {}]
  %s7 = inlined_call_operand.vmem [shape: f32[8,32], index: 7, kind: output, shape index: {}]
  %s8 = sld [smem:[#allocation0]]
  $region38: #{_lambda_.1} parent=0
    _
  %s10 = ssub.s32 1, %s8
  %s11 = scalar_select 0, %s10, %s8
  // Predicated region
  $region2: #{_lambda_.1} parent=0 // pred_check
    _
  $region3: #{_lambda_.1} parent=0 // pred_check_branch
    %13 = sbr.rel (0) target = $region5
  $region4: #{_lambda_.1} parent=0 // pred_region
    _
  $region5: #{_lambda_.1} parent=0 // pred_fallthru
    _
  // Predicated region
  $region6: #{_lambda_.1} parent=0 // pred_check
    _
  $region7: #{_lambda_.1} parent=0 // pred_check_branch
    %15 = sbr.rel (0) target = $region9
  $region8: #{_lambda_.1} parent=0 // pred_region
    _
  $region9: #{_lambda_.1} parent=0 // pred_fallthru
    _
  // Predicated region
  $region10: #{_lambda_.1} parent=0 // pred_check
    _
  $region11: #{_lambda_.1} parent=0 // pred_check_branch
    %17 = sbr.rel (0) target = $region13
  $region12: #{_lambda_.1} parent=0 // pred_region
    _
  $region13: #{_lambda_.1} parent=0 // pred_fallthru
    _
  // Predicated region
  $region14: #{_lambda_.1} parent=0 // pred_check
    _
  $region15: #{_lambda_.1} parent=0 // pred_check_branch
    %19 = sbr.rel (0) target = $region17
  $region16: #{_lambda_.1} parent=0 // pred_region
    _
  $region17: #{_lambda_.1} parent=0 // pred_fallthru
    _
  // Predicated region
  $region18: #{_lambda_.1} parent=0 // pred_check
    _
  $region19: #{_lambda_.1} parent=0 // pred_check_branch
    %21 = sbr.rel (0) target = $region21
  $region20: #{_lambda_.1} parent=0 // pred_region
    _
  $region21: #{_lambda_.1} parent=0 // pred_fallthru
    _
  // Predicated region
  $region22: #{_lambda_.1} parent=0 // pred_check
    _
  $region23: #{_lambda_.1} parent=0 // pred_check_branch
    %23 = sbr.rel (0) target = $region25
  $region24: #{_lambda_.1} parent=0 // pred_region
    _
  $region25: #{_lambda_.1} parent=0 // pred_fallthru
    _
  // Predicated region
  $region26: #{_lambda_.1} parent=0 // pred_check
    _
  $region27: #{_lambda_.1} parent=0 // pred_check_branch
    %25 = sbr.rel (0) target = $region29
  $region28: #{_lambda_.1} parent=0 // pred_region
    _
  $region29: #{_lambda_.1} parent=0 // pred_fallthru
    _
  %v27 = vld [vmem:[%s0] sm:$0xf]
  %v28 = vunpack.c.l.bf16 %v27
  %v29 = vld [vmem:[%s1] sm:$0xff]
  %v30 = vld [vmem:[%s1 + $0x8] sm:$0xff]
  %v31 = vld [vmem:[%s1 + $0x10] sm:$0xff]
  %v32 = vunpack.c.l.bf16 %v29
  %v33 = vunpack.c.h.bf16 %v29
  %v34 = vunpack.c.l.bf16 %v30
  %v35 = vunpack.c.h.bf16 %v30
  %v36 = vunpack.c.l.bf16 %v31
  %v37 = vunpack.c.h.bf16 %v31
  %v38 = vld [vmem:[%s2] sm:$0xff]
  %v39 = vld [vmem:[%s2 + $0x8] sm:$0xff]
  %v40 = vld [vmem:[%s2 + $0x10] sm:$0xf]
  %v41 = vunpack.c.l.bf16 %v38
  %v42 = vunpack.c.h.bf16 %v38
  %v43 = vunpack.c.l.bf16 %v39
  %v44 = vunpack.c.h.bf16 %v39
  %v45 = vunpack.c.l.bf16 %v40
  %v46 = vld [vmem:[%s3] sm:$0xf]
  %v47 = vld [vmem:[%s3 + $0x4] sm:$0xf]
  %v48 = vld [vmem:[%s3 + $0x8] sm:$0xf]
  %v49 = vld [vmem:[%s3 + $0xc] sm:$0xf]
  %v50 = vld [vmem:[%s4] sm:$0xf]
  %v51 = vld [vmem:[%s4 + $0x4] sm:$0xf]
  %v52 = vld [vmem:[%s4 + $0x8] sm:$0xf]
  %v53 = vld [vmem:[%s4 + $0xc] sm:$0xf]
  %v54 = vld [vmem:[%s4 + $0x10] sm:$0xf]
  %v55 = vld [vmem:[%s4 + $0x14] sm:$0xf]
  %v56 = vld [vmem:[%s4 + $0x18] sm:$0xf]
  %v57 = vld [vmem:[%s4 + $0x1c] sm:$0xf]
  %v58 = vld [vmem:[%s4 + $0x20] sm:$0xf]
  %v59 = vld [vmem:[%s4 + $0x24] sm:$0xf]
  %v60 = vld [vmem:[%s4 + $0x28] sm:$0xf]
  %v61 = vld [vmem:[%s4 + $0x2c] sm:$0xf]
  %v62 = vld [vmem:[%s4 + $0x30] sm:$0xf]
  %v63 = vld [vmem:[%s4 + $0x34] sm:$0xf]
  %v64 = vld [vmem:[%s4 + $0x38] sm:$0xf]
  %v65 = vld [vmem:[%s4 + $0x3c] sm:$0xf]
  %v66 = vld [vmem:[%s5] sm:$0x1]
  %v67 = vld [vmem:[%s6] sm:$0x1]
  %v68 = vmul.f32 %v41, %v28
  %vm69 = vcmask 261120
  %v70 = vsel %vm69, %v68, 0.0
  %71 = vadd.xlane.f32.xlu0 %v70
  %v72 = vpop.xlane.xlu0 %71
  %v73 = vmul.f32 %v72, 0.03125
  %75 = vrot.lane.b32.xlu0 %v28, 32
  %v76 = vpop.permute.xlu0 %75
  %v78 = vmul.f32 %v41, %v76
  %80 = vrot.lane.b32.xlu0 %v78, 96
  %v81 = vpop.permute.xlu0 %80
  %v83 = vsel %vm69, %v81, 0.0
  %84 = vadd.xlane.f32.xlu0 %v83
  %v85 = vpop.xlane.xlu0 %84
  %v86 = vmul.f32 %v85, 0.03125
  %87 = vrot.lane.b32.xlu0 %v28, 64
  %v88 = vpop.permute.xlu0 %87
  %v90 = vmul.f32 %v41, %v88
  %92 = vrot.lane.b32.xlu0 %v90, 64
  %v93 = vpop.permute.xlu0 %92
  %v95 = vsel %vm69, %v93, 0.0
  %96 = vadd.xlane.f32.xlu0 %v95
  %v97 = vpop.xlane.xlu0 %96
  %v98 = vmul.f32 %v97, 0.03125
  %99 = vrot.lane.b32.xlu0 %v28, 96
  %v100 = vpop.permute.xlu0 %99
  %v102 = vmul.f32 %v41, %v100
  %104 = vrot.lane.b32.xlu0 %v102, 32
  %v105 = vpop.permute.xlu0 %104
  %v107 = vsel %vm69, %v105, 0.0
  %108 = vadd.xlane.f32.xlu0 %v107
  %v109 = vpop.xlane.xlu0 %108
  %v110 = vmul.f32 %v109, 0.03125
  %v111 = vmax.f32 %v73, %v86
  %v112 = vmax.f32 %v111, %v98
  %v113 = vmax.f32 %v112, %v110
  %v114 = vsub.f32 %v73, %v113
  %v115 = vmul.f32 %v114, 1.442695
  %v116 = vpow.pop %v115
  %v117 = vsub.f32 %v86, %v113
  %v118 = vmul.f32 %v117, 1.442695
  %v119 = vpow.pop %v118
  %v120 = vsub.f32 %v98, %v113
  %v121 = vmul.f32 %v120, 1.442695
  %v122 = vpow.pop %v121
  %v123 = vsub.f32 %v110, %v113
  %v124 = vmul.f32 %v123, 1.442695
  %v125 = vpow.pop %v124
  %v126 = vadd.f32 %v116, %v119
  %v127 = vadd.f32 %v126, %v122
  %v128 = vadd.f32 %v127, %v125
  %v129 = vmul.f32 %v128, 4.0
  %v130 = vrcp.pop %v129
  %v131 = vmul.f32 %v116, %v32
  %v132 = vmul.f32 %v119, %v32
  %134 = vrot.lane.b32.xlu0 %v132, 96
  %v135 = vpop.permute.xlu0 %134
  %v137 = vadd.f32 %v131, %v135
  %v138 = vmul.f32 %v122, %v32
  %140 = vrot.lane.b32.xlu0 %v138, 64
  %v141 = vpop.permute.xlu0 %140
  %v143 = vadd.f32 %v137, %v141
  %v144 = vmul.f32 %v125, %v33
  %146 = vrot.lane.b32.xlu0 %v144, 32
  %v147 = vpop.permute.xlu0 %146
  %v149 = vadd.f32 %v143, %v147
  %v150 = vmul.f32 %v149, %v130
  %152 = vrot.lane.b32.xlu0 %v150, 96
  %v153 = vpop.permute.xlu0 %152
  %v155 = vadd.f32 %v32, %v153
  %v156 = vpack.c.bf16 %v155, %v155
  %v158 = vlaneseq
  %v159 = vshrl.u32 %v158, 7
  %v160 = vsub.s32 0, %v159
  %v161 = vrot.slane %v66, %v160
  %v167 = vunpack.c.l.b16 %v46
  %v168 = vunpack.c.l.b16 %v47
  %v169 = vunpack.c.l.b16 %v48
  %v170 = vunpack.c.l.b16 %v49
  %v171 = vpack.c.b16 %v168, %v167
  %v172 = vpack.c.b16 %v170, %v169
  %v176 = vsel %vm69, %v156, 0
  %178 = vmatprep.subr.bf16.mxu0 0
  %179 = vmatpush1.bf16.msra.mxu0 %v171
  %180 = vmatprep.subr.bf16.mxu0 0
  %181 = vmatpush1.bf16.msra.mxu0 %v172
  %182 = vmatprep.subr.bf16.mxu0 0
  %183 = vmatpush1.bf16.msra.mxu0 0
  %184 = vmatprep.subr.bf16.mxu0 0
  %185 = vmatpush1.bf16.msra.mxu0 0
  %186 = vmatprep.subr.bf16.mxu0 0
  %187 = vmatpush1.bf16.msra.mxu0 0
  %188 = vmatprep.subr.bf16.mxu0 0
  %189 = vmatpush1.bf16.msra.mxu0 0
  %190 = vmatprep.subr.bf16.mxu0 0
  %191 = vmatpush1.bf16.msra.mxu0 0
  %192 = vmatprep.subr.bf16.mxu0 0
  %193 = vmatpush1.bf16.msra.mxu0 0
  %194 = vmatprep.subr.bf16.mxu0 0
  %195 = vmatpush1.bf16.msra.mxu0 0
  %196 = vmatprep.subr.bf16.mxu0 0
  %197 = vmatpush1.bf16.msra.mxu0 0
  %198 = vmatprep.subr.bf16.mxu0 0
  %199 = vmatpush1.bf16.msra.mxu0 0
  %200 = vmatprep.subr.bf16.mxu0 0
  %201 = vmatpush1.bf16.msra.mxu0 0
  %202 = vmatprep.subr.bf16.mxu0 0
  %203 = vmatpush1.bf16.msra.mxu0 0
  %204 = vmatprep.subr.bf16.mxu0 0
  %205 = vmatpush1.bf16.msra.mxu0 0
  %206 = vmatprep.subr.bf16.mxu0 0
  %207 = vmatpush1.bf16.msra.mxu0 0
  %208 = vmatprep.subr.bf16.mxu0 0
  %209 = vmatpush1.bf16.msra.mxu0 0
  %210 = vmatprep.mubr.bf16.mxu0 0
  %211 = vmatmul.mubr.bf16.gmra.mrb[0].mxu0 %v176
  %v212 = vpop.f32.mrb[0].mxu0
  %v213 = vadd.f32 %v161, %v212
  %v214 = vpop.f32.mrb[0].mxu0
  %v215 = vpop.f32.mrb[0].mxu0
  %v216 = vpop.f32.mrb[0].mxu0
  %217 = vdwg.mxu0
  %v218 = vmax.f32 %v213, 0.0
  %v219 = vmul.f32 %v42, %v28
  %v220 = vsel %vm69, %v219, 0.0
  %221 = vadd.xlane.f32.xlu0 %v220
  %v222 = vpop.xlane.xlu0 %221
  %v223 = vmul.f32 %v222, 0.03125
  %v224 = vmul.f32 %v42, %v76
  %226 = vrot.lane.b32.xlu0 %v224, 96
  %v227 = vpop.permute.xlu0 %226
  %v229 = vsel %vm69, %v227, 0.0
  %230 = vadd.xlane.f32.xlu0 %v229
  %v231 = vpop.xlane.xlu0 %230
  %v232 = vmul.f32 %v231, 0.03125
  %v233 = vmul.f32 %v42, %v88
  %235 = vrot.lane.b32.xlu0 %v233, 64
  %v236 = vpop.permute.xlu0 %235
  %v238 = vsel %vm69, %v236, 0.0
  %239 = vadd.xlane.f32.xlu0 %v238
  %v240 = vpop.xlane.xlu0 %239
  %v241 = vmul.f32 %v240, 0.03125
  %v242 = vmul.f32 %v42, %v100
  %244 = vrot.lane.b32.xlu0 %v242, 32
  %v245 = vpop.permute.xlu0 %244
  %v247 = vsel %vm69, %v245, 0.0
  %248 = vadd.xlane.f32.xlu0 %v247
  %v249 = vpop.xlane.xlu0 %248
  %v250 = vmul.f32 %v249, 0.03125
  %v251 = vmax.f32 %v223, %v232
  %v252 = vmax.f32 %v251, %v241
  %v253 = vmax.f32 %v252, %v250
  %v254 = vsub.f32 %v223, %v253
  %v255 = vmul.f32 %v254, 1.442695
  %v256 = vpow.pop %v255
  %v257 = vsub.f32 %v232, %v253
  %v258 = vmul.f32 %v257, 1.442695
  %v259 = vpow.pop %v258
  %v260 = vsub.f32 %v241, %v253
  %v261 = vmul.f32 %v260, 1.442695
  %v262 = vpow.pop %v261
  %v263 = vsub.f32 %v250, %v253
  %v264 = vmul.f32 %v263, 1.442695
  %v265 = vpow.pop %v264
  %v266 = vadd.f32 %v256, %v259
  %v267 = vadd.f32 %v266, %v262
  %v268 = vadd.f32 %v267, %v265
  %v269 = vmul.f32 %v268, 4.0
  %v270 = vrcp.pop %v269
  %v271 = vmul.f32 %v256, %v33
  %v272 = vmul.f32 %v259, %v33
  %274 = vrot.lane.b32.xlu0 %v272, 96
  %v275 = vpop.permute.xlu0 %274
  %v277 = vadd.f32 %v271, %v275
  %v278 = vmul.f32 %v262, %v33
  %280 = vrot.lane.b32.xlu0 %v278, 64
  %v281 = vpop.permute.xlu0 %280
  %v283 = vadd.f32 %v277, %v281
  %v284 = vmul.f32 %v265, %v34
  %286 = vrot.lane.b32.xlu0 %v284, 32
  %v287 = vpop.permute.xlu0 %286
  %v289 = vadd.f32 %v283, %v287
  %v290 = vmul.f32 %v289, %v270
  %v291 = vmul.f32 %v43, %v28
  %v292 = vsel %vm69, %v291, 0.0
  %293 = vadd.xlane.f32.xlu0 %v292
  %v294 = vpop.xlane.xlu0 %293
  %v295 = vmul.f32 %v294, 0.03125
  %v296 = vmul.f32 %v43, %v76
  %298 = vrot.lane.b32.xlu0 %v296, 96
  %v299 = vpop.permute.xlu0 %298
  %v301 = vsel %vm69, %v299, 0.0
  %302 = vadd.xlane.f32.xlu0 %v301
  %v303 = vpop.xlane.xlu0 %302
  %v304 = vmul.f32 %v303, 0.03125
  %v305 = vmul.f32 %v43, %v88
  %307 = vrot.lane.b32.xlu0 %v305, 64
  %v308 = vpop.permute.xlu0 %307
  %v310 = vsel %vm69, %v308, 0.0
  %311 = vadd.xlane.f32.xlu0 %v310
  %v312 = vpop.xlane.xlu0 %311
  %v313 = vmul.f32 %v312, 0.03125
  %v314 = vmul.f32 %v43, %v100
  %316 = vrot.lane.b32.xlu0 %v314, 32
  %v317 = vpop.permute.xlu0 %316
  %v319 = vsel %vm69, %v317, 0.0
  %320 = vadd.xlane.f32.xlu0 %v319
  %v321 = vpop.xlane.xlu0 %320
  %v322 = vmul.f32 %v321, 0.03125
  %v323 = vmax.f32 %v295, %v304
  %v324 = vmax.f32 %v323, %v313
  %v325 = vmax.f32 %v324, %v322
  %v326 = vsub.f32 %v295, %v325
  %v327 = vmul.f32 %v326, 1.442695
  %v328 = vpow.pop %v327
  %v329 = vsub.f32 %v304, %v325
  %v330 = vmul.f32 %v329, 1.442695
  %v331 = vpow.pop %v330
  %v332 = vsub.f32 %v313, %v325
  %v333 = vmul.f32 %v332, 1.442695
  %v334 = vpow.pop %v333
  %v335 = vsub.f32 %v322, %v325
  %v336 = vmul.f32 %v335, 1.442695
  %v337 = vpow.pop %v336
  %v338 = vadd.f32 %v328, %v331
  %v339 = vadd.f32 %v338, %v334
  %v340 = vadd.f32 %v339, %v337
  %v341 = vmul.f32 %v340, 4.0
  %v342 = vrcp.pop %v341
  %v343 = vmul.f32 %v328, %v34
  %v344 = vmul.f32 %v331, %v34
  %346 = vrot.lane.b32.xlu0 %v344, 96
  %v347 = vpop.permute.xlu0 %346
  %v349 = vadd.f32 %v343, %v347
  %v350 = vmul.f32 %v334, %v34
  %352 = vrot.lane.b32.xlu0 %v350, 64
  %v353 = vpop.permute.xlu0 %352
  %v355 = vadd.f32 %v349, %v353
  %v356 = vmul.f32 %v337, %v35
  %358 = vrot.lane.b32.xlu0 %v356, 32
  %v359 = vpop.permute.xlu0 %358
  %v361 = vadd.f32 %v355, %v359
  %v362 = vmul.f32 %v361, %v342
  %v363 = vmul.f32 %v44, %v28
  %v364 = vsel %vm69, %v363, 0.0
  %365 = vadd.xlane.f32.xlu0 %v364
  %v366 = vpop.xlane.xlu0 %365
  %v367 = vmul.f32 %v366, 0.03125
  %v368 = vmul.f32 %v44, %v76
  %370 = vrot.lane.b32.xlu0 %v368, 96
  %v371 = vpop.permute.xlu0 %370
  %v373 = vsel %vm69, %v371, 0.0
  %374 = vadd.xlane.f32.xlu0 %v373
  %v375 = vpop.xlane.xlu0 %374
  %v376 = vmul.f32 %v375, 0.03125
  %v377 = vmul.f32 %v44, %v88
  %379 = vrot.lane.b32.xlu0 %v377, 64
  %v380 = vpop.permute.xlu0 %379
  %v382 = vsel %vm69, %v380, 0.0
  %383 = vadd.xlane.f32.xlu0 %v382
  %v384 = vpop.xlane.xlu0 %383
  %v385 = vmul.f32 %v384, 0.03125
  %v386 = vmul.f32 %v44, %v100
  %388 = vrot.lane.b32.xlu0 %v386, 32
  %v389 = vpop.permute.xlu0 %388
  %v391 = vsel %vm69, %v389, 0.0
  %392 = vadd.xlane.f32.xlu0 %v391
  %v393 = vpop.xlane.xlu0 %392
  %v394 = vmul.f32 %v393, 0.03125
  %v395 = vmax.f32 %v367, %v376
  %v396 = vmax.f32 %v395, %v385
  %v397 = vmax.f32 %v396, %v394
  %v398 = vsub.f32 %v367, %v397
  %v399 = vmul.f32 %v398, 1.442695
  %v400 = vpow.pop %v399
  %v401 = vsub.f32 %v376, %v397
  %v402 = vmul.f32 %v401, 1.442695
  %v403 = vpow.pop %v402
  %v404 = vsub.f32 %v385, %v397
  %v405 = vmul.f32 %v404, 1.442695
  %v406 = vpow.pop %v405
  %v407 = vsub.f32 %v394, %v397
  %v408 = vmul.f32 %v407, 1.442695
  %v409 = vpow.pop %v408
  %v410 = vadd.f32 %v400, %v403
  %v411 = vadd.f32 %v410, %v406
  %v412 = vadd.f32 %v411, %v409
  %v413 = vmul.f32 %v412, 4.0
  %v414 = vrcp.pop %v413
  %v415 = vmul.f32 %v400, %v35
  %v416 = vmul.f32 %v403, %v35
  %418 = vrot.lane.b32.xlu0 %v416, 96
  %v419 = vpop.permute.xlu0 %418
  %v421 = vadd.f32 %v415, %v419
  %v422 = vmul.f32 %v406, %v35
  %424 = vrot.lane.b32.xlu0 %v422, 64
  %v425 = vpop.permute.xlu0 %424
  %v427 = vadd.f32 %v421, %v425
  %v428 = vmul.f32 %v409, %v36
  %430 = vrot.lane.b32.xlu0 %v428, 32
  %v431 = vpop.permute.xlu0 %430
  %v433 = vadd.f32 %v427, %v431
  %v434 = vmul.f32 %v433, %v414
  %v435 = vmul.f32 %v45, %v28
  %v436 = vsel %vm69, %v435, 0.0
  %437 = vadd.xlane.f32.xlu0 %v436
  %v438 = vpop.xlane.xlu0 %437
  %v439 = vmul.f32 %v438, 0.03125
  %v440 = vmul.f32 %v45, %v76
  %442 = vrot.lane.b32.xlu0 %v440, 96
  %v443 = vpop.permute.xlu0 %442
  %v445 = vsel %vm69, %v443, 0.0
  %446 = vadd.xlane.f32.xlu0 %v445
  %v447 = vpop.xlane.xlu0 %446
  %v448 = vmul.f32 %v447, 0.03125
  %v449 = vmul.f32 %v45, %v88
  %451 = vrot.lane.b32.xlu0 %v449, 64
  %v452 = vpop.permute.xlu0 %451
  %v454 = vsel %vm69, %v452, 0.0
  %455 = vadd.xlane.f32.xlu0 %v454
  %v456 = vpop.xlane.xlu0 %455
  %v457 = vmul.f32 %v456, 0.03125
  %v458 = vmul.f32 %v45, %v100
  %460 = vrot.lane.b32.xlu0 %v458, 32
  %v461 = vpop.permute.xlu0 %460
  %v463 = vsel %vm69, %v461, 0.0
  %464 = vadd.xlane.f32.xlu0 %v463
  %v465 = vpop.xlane.xlu0 %464
  %v466 = vmul.f32 %v465, 0.03125
  %v467 = vmax.f32 %v439, %v448
  %v468 = vmax.f32 %v467, %v457
  %v469 = vmax.f32 %v468, %v466
  %v470 = vsub.f32 %v439, %v469
  %v471 = vmul.f32 %v470, 1.442695
  %v472 = vpow.pop %v471
  %v473 = vsub.f32 %v448, %v469
  %v474 = vmul.f32 %v473, 1.442695
  %v475 = vpow.pop %v474
  %v476 = vsub.f32 %v457, %v469
  %v477 = vmul.f32 %v476, 1.442695
  %v478 = vpow.pop %v477
  %v479 = vsub.f32 %v466, %v469
  %v480 = vmul.f32 %v479, 1.442695
  %v481 = vpow.pop %v480
  %v482 = vadd.f32 %v472, %v475
  %v483 = vadd.f32 %v482, %v478
  %v484 = vadd.f32 %v483, %v481
  %v485 = vmul.f32 %v484, 4.0
  %v486 = vrcp.pop %v485
  %v487 = vmul.f32 %v472, %v36
  %v488 = vmul.f32 %v475, %v36
  %490 = vrot.lane.b32.xlu0 %v488, 96
  %v491 = vpop.permute.xlu0 %490
  %v493 = vadd.f32 %v487, %v491
  %v494 = vmul.f32 %v478, %v36
  %496 = vrot.lane.b32.xlu0 %v494, 64
  %v497 = vpop.permute.xlu0 %496
  %v499 = vadd.f32 %v493, %v497
  %v500 = vmul.f32 %v481, %v37
  %502 = vrot.lane.b32.xlu0 %v500, 32
  %v503 = vpop.permute.xlu0 %502
  %v505 = vadd.f32 %v499, %v503
  %v506 = vmul.f32 %v505, %v486
  %508 = vrot.lane.b32.xlu0 %v290, 96
  %v509 = vpop.permute.xlu0 %508
  %512 = vrot.lane.b32.xlu0 %v434, 32
  %v513 = vpop.permute.xlu0 %512
  %516 = vrot.lane.b32.xlu0 %v506, 64
  %v517 = vpop.permute.xlu0 %516
  %v519 = vsel %vm69, %v509, %v362
  %vm520 = vcmask 523264
  %v521 = vsel %vm520, %v519, %v513
  %vm522 = vcmask 785408
  %v523 = vsel %vm522, %v521, %v517
  %525 = vrot.lane.b32.xlu0 %v523, 32
  %v526 = vpop.permute.xlu0 %525
  %v528 = vadd.f32 %v32, %v526
  %v529 = vadd.f32 %v33, %v526
  %v530 = vpack.c.bf16 %v528, %v528
  %v531 = vpack.c.bf16 %v529, %v529
  %v533 = vlaneseq
  %v534 = vshrl.u32 %v533, 7
  %v535 = vsub.s32 0, %v534
  %v536 = vrot.slane %v67, %v535
  %540 = vrot.lane.b32.xlu0 %v530, 96
  %v541 = vpop.permute.xlu0 %540
  %542 = vrot.lane.b32.xlu0 %v531, 96
  %v543 = vpop.permute.xlu0 %542
  %vm544 = vcmask 785408
  %v545 = vsel %vm544, %v541, %v543
  %v563 = vunpack.c.l.b16 %v50
  %v564 = vunpack.c.l.b16 %v51
  %v565 = vunpack.c.l.b16 %v52
  %v566 = vunpack.c.l.b16 %v53
  %v567 = vunpack.c.l.b16 %v54
  %v568 = vunpack.c.l.b16 %v55
  %v569 = vunpack.c.l.b16 %v56
  %v570 = vunpack.c.l.b16 %v57
  %v571 = vunpack.c.l.b16 %v58
  %v572 = vunpack.c.l.b16 %v59
  %v573 = vunpack.c.l.b16 %v60
  %v574 = vunpack.c.l.b16 %v61
  %v575 = vunpack.c.l.b16 %v62
  %v576 = vunpack.c.l.b16 %v63
  %v577 = vunpack.c.l.b16 %v64
  %v578 = vunpack.c.l.b16 %v65
  %v579 = vpack.c.b16 %v564, %v563
  %v580 = vpack.c.b16 %v566, %v565
  %v581 = vpack.c.b16 %v568, %v567
  %v582 = vpack.c.b16 %v570, %v569
  %v583 = vpack.c.b16 %v572, %v571
  %v584 = vpack.c.b16 %v574, %v573
  %v585 = vpack.c.b16 %v576, %v575
  %v586 = vpack.c.b16 %v578, %v577
  %595 = vmatprep.subr.bf16.mxu0 0
  %596 = vmatpush1.bf16.msra.mxu0 %v579
  %597 = vmatprep.subr.bf16.mxu0 0
  %598 = vmatpush1.bf16.msra.mxu0 %v580
  %599 = vmatprep.subr.bf16.mxu0 0
  %600 = vmatpush1.bf16.msra.mxu0 %v581
  %601 = vmatprep.subr.bf16.mxu0 0
  %602 = vmatpush1.bf16.msra.mxu0 %v582
  %603 = vmatprep.subr.bf16.mxu0 0
  %604 = vmatpush1.bf16.msra.mxu0 %v583
  %605 = vmatprep.subr.bf16.mxu0 0
  %606 = vmatpush1.bf16.msra.mxu0 %v584
  %607 = vmatprep.subr.bf16.mxu0 0
  %608 = vmatpush1.bf16.msra.mxu0 %v585
  %609 = vmatprep.subr.bf16.mxu0 0
  %610 = vmatpush1.bf16.msra.mxu0 %v586
  %611 = vmatprep.subr.bf16.mxu0 0
  %612 = vmatpush1.bf16.msra.mxu0 0
  %613 = vmatprep.subr.bf16.mxu0 0
  %614 = vmatpush1.bf16.msra.mxu0 0
  %615 = vmatprep.subr.bf16.mxu0 0
  %616 = vmatpush1.bf16.msra.mxu0 0
  %617 = vmatprep.subr.bf16.mxu0 0
  %618 = vmatpush1.bf16.msra.mxu0 0
  %619 = vmatprep.subr.bf16.mxu0 0
  %620 = vmatpush1.bf16.msra.mxu0 0
  %621 = vmatprep.subr.bf16.mxu0 0
  %622 = vmatpush1.bf16.msra.mxu0 0
  %623 = vmatprep.subr.bf16.mxu0 0
  %624 = vmatpush1.bf16.msra.mxu0 0
  %625 = vmatprep.subr.bf16.mxu0 0
  %626 = vmatpush1.bf16.msra.mxu0 0
  %627 = vmatprep.mubr.bf16.mxu0 0
  %628 = vmatmul.mubr.bf16.gmra.mrb[0].mxu0 %v545
  %v629 = vpop.f32.mrb[0].mxu0
  %v630 = vadd.f32 %v536, %v629
  %v631 = vpop.f32.mrb[0].mxu0
  %v632 = vpop.f32.mrb[0].mxu0
  %v633 = vpop.f32.mrb[0].mxu0
  %634 = vdwg.mxu0
  %v635 = vmax.f32 %v630, 0.0
  %s636 = scalar_lea.vmem %s3, 16
  %v637 = vld [vmem:[%s636] sm:$0xf]
  %v638 = vld [vmem:[%s636 + $0x4] sm:$0xf]
  %v639 = vld [vmem:[%s636 + $0x8] sm:$0xf]
  %v640 = vld [vmem:[%s636 + $0xc] sm:$0xf]
  %s641 = scalar_lea.vmem %s5, 1
  %v642 = vld [vmem:[%s641] sm:$0x1]
  %v643 = vmul.f32 %v116, %v635
  %v644 = vmul.f32 %v119, %v635
  %646 = vrot.lane.b32.xlu0 %v644, 96
  %v647 = vpop.permute.xlu0 %646
  %v649 = vadd.f32 %v643, %v647
  %v650 = vmul.f32 %v122, %v635
  %652 = vrot.lane.b32.xlu0 %v650, 64
  %v653 = vpop.permute.xlu0 %652
  %v655 = vadd.f32 %v649, %v653
  %v656 = vmul.f32 %v125, %v635
  %658 = vrot.lane.b32.xlu0 %v656, 32
  %v659 = vpop.permute.xlu0 %658
  %v661 = vadd.f32 %v655, %v659
  %v662 = vmul.f32 %v661, %v130
  %v663 = vadd.f32 %v218, %v662
  %v664 = vpack.c.bf16 %v663, %v663
  %v666 = vlaneseq
  %v667 = vshrl.u32 %v666, 7
  %v668 = vsub.s32 0, %v667
  %v669 = vrot.slane %v642, %v668
  %v675 = vunpack.c.l.b16 %v637
  %v676 = vunpack.c.l.b16 %v638
  %v677 = vunpack.c.l.b16 %v639
  %v678 = vunpack.c.l.b16 %v640
  %v679 = vpack.c.b16 %v676, %v675
  %v680 = vpack.c.b16 %v678, %v677
  %v684 = vsel %vm69, %v664, 0
  %686 = vmatprep.subr.bf16.mxu0 0
  %687 = vmatpush1.bf16.msra.mxu0 %v679
  %688 = vmatprep.subr.bf16.mxu0 0
  %689 = vmatpush1.bf16.msra.mxu0 %v680
  %690 = vmatprep.subr.bf16.mxu0 0
  %691 = vmatpush1.bf16.msra.mxu0 0
  %692 = vmatprep.subr.bf16.mxu0 0
  %693 = vmatpush1.bf16.msra.mxu0 0
  %694 = vmatprep.subr.bf16.mxu0 0
  %695 = vmatpush1.bf16.msra.mxu0 0
  %696 = vmatprep.subr.bf16.mxu0 0
  %697 = vmatpush1.bf16.msra.mxu0 0
  %698 = vmatprep.subr.bf16.mxu0 0
  %699 = vmatpush1.bf16.msra.mxu0 0
  %700 = vmatprep.subr.bf16.mxu0 0
  %701 = vmatpush1.bf16.msra.mxu0 0
  %702 = vmatprep.subr.bf16.mxu0 0
  %703 = vmatpush1.bf16.msra.mxu0 0
  %704 = vmatprep.subr.bf16.mxu0 0
  %705 = vmatpush1.bf16.msra.mxu0 0
  %706 = vmatprep.subr.bf16.mxu0 0
  %707 = vmatpush1.bf16.msra.mxu0 0
  %708 = vmatprep.subr.bf16.mxu0 0
  %709 = vmatpush1.bf16.msra.mxu0 0
  %710 = vmatprep.subr.bf16.mxu0 0
  %711 = vmatpush1.bf16.msra.mxu0 0
  %712 = vmatprep.subr.bf16.mxu0 0
  %713 = vmatpush1.bf16.msra.mxu0 0
  %714 = vmatprep.subr.bf16.mxu0 0
  %715 = vmatpush1.bf16.msra.mxu0 0
  %716 = vmatprep.subr.bf16.mxu0 0
  %717 = vmatpush1.bf16.msra.mxu0 0
  %718 = vmatprep.mubr.bf16.mxu0 0
  %719 = vmatmul.mubr.bf16.gmra.mrb[0].mxu0 %v684
  %v720 = vpop.f32.mrb[0].mxu0
  %v721 = vadd.f32 %v669, %v720
  %v722 = vpop.f32.mrb[0].mxu0
  %v723 = vpop.f32.mrb[0].mxu0
  %v724 = vpop.f32.mrb[0].mxu0
  %725 = vdwg.mxu0
  %v726 = vtanh.pop %v721
  %727 = vst.msk [vmem:[%s7] sm:$0xff] %vm69, %v726
  // Predicated region
  $region30: #{_lambda_.1} parent=0 // pred_check
    _
  $region31: #{_lambda_.1} parent=0 // pred_check_branch
    %729 = sbr.rel (0) target = $region33
  $region32: #{_lambda_.1} parent=0 // pred_region
    _
  $region33: #{_lambda_.1} parent=0 // pred_fallthru
    _
  // Predicated region
  $region34: #{_lambda_.1} parent=0 // pred_check
    _
  $region35: #{_lambda_.1} parent=0 // pred_check_branch
    %731 = sbr.rel (0) target = $region37
  $region36: #{_lambda_.1} parent=0 // pred_region
    _
  $region37: #{_lambda_.1} parent=0 // pred_fallthru
    _

</llo_original>
